<compile_context>
chip_gen: v5e
topology: v5e:2x2
jax: 0.10.0
libtpu: 0.0.40
codegen_flags: <defaults>
</compile_context>

<pallas_src>
import jax
import jax.numpy as jnp
from jax.experimental import pallas as pl
from jax.experimental.pallas import tpu as pltpu


def dueling_kernel(x_ref, w1_ref, b1_ref, wva_ref, bva_ref, o_ref):
    # Hidden layer: (TB, D)bf16 @ (D, 512)bf16 -> f32, + bias, ReLU (f32 epilogue).
    h = jnp.dot(x_ref[...], w1_ref[...], preferred_element_type=jnp.float32)
    h = jnp.maximum(h + b1_ref[...], 0.0)
    # Fused V|A head: (TB, 512) @ (512, 128) -> one lane-dense (TB, 128) slab.
    o = jnp.dot(h.astype(wva_ref.dtype), wva_ref[...],
                preferred_element_type=jnp.float32)
    o_ref[...] = (o + bva_ref[...]).astype(o_ref.dtype)


def dueling_forward(state, w1, b1, wv, bv, wa, ba, *, tile_b=256):
    """state: (B, input_dim) f32 -> (V: (B, 1) f32, A: (B, n_actions) f32)."""
    B, D = state.shape
    H = w1.shape[1]
    nA = wa.shape[1]
    head = 1 + nA
    head_pad = max(128, ((head + 127) // 128) * 128)   # lane-dense output width

    # --- Fuse the two heads into one lane-padded weight/bias (done in wrapper,
    # constant-folded under jit; the kernel sees a single head matmul). ---
    wva = jnp.zeros((H, head_pad), jnp.float32)
    wva = wva.at[:, :1].set(wv).at[:, 1:head].set(wa)
    bva = jnp.zeros((1, head_pad), jnp.float32)
    bva = bva.at[:, :1].set(bv).at[:, 1:head].set(ba)

    # bf16 operands for the MXU (f32 accumulation inside the kernel).
    x_bf = state.astype(jnp.bfloat16)
    w1_bf = w1.astype(jnp.bfloat16)
    wva_bf = wva.astype(jnp.bfloat16)

    # --- Batch tiling: weights stay VMEM-resident, batch tiles stream. ---
    tile_b = max(8, min(tile_b, ((B + 7) // 8) * 8))   # sublane-aligned tile
    B_pad = ((B + tile_b - 1) // tile_b) * tile_b
    if B_pad != B:
        x_bf = jnp.pad(x_bf, ((0, B_pad - B), (0, 0)))
    n_tiles = B_pad // tile_b

    out = pl.pallas_call(
        dueling_kernel,
        out_shape=jax.ShapeDtypeStruct((B_pad, head_pad), jnp.float32),
        grid=(n_tiles,),
        in_specs=[
            pl.BlockSpec((tile_b, D), lambda i: (i, 0)),       # state tile
            pl.BlockSpec((D, H), lambda i: (0, 0)),            # fc1 weight (resident)
            pl.BlockSpec((1, H), lambda i: (0, 0)),            # fc1 bias   (resident)
            pl.BlockSpec((H, head_pad), lambda i: (0, 0)),     # fused V|A weight
            pl.BlockSpec((1, head_pad), lambda i: (0, 0)),     # fused V|A bias
        ],
        out_specs=pl.BlockSpec((tile_b, head_pad), lambda i: (i, 0)),
        compiler_params=pltpu.CompilerParams(
            dimension_semantics=("parallel",)),                # v7x: shard over 2 TCs
    )(x_bf, w1_bf, b1, wva_bf, bva)

    V = out[:B, :1]
    A = out[:B, 1:head]
    return V, A


def init_params(key, input_dim, hidden, n_actions):
    """Deterministic init mimicking nn.Linear's uniform(-1/sqrt(fan_in), ...)."""
    ks = jax.random.split(key, 6)

    def u(k, shape, fan_in):
        bound = 1.0 / jnp.sqrt(fan_in)
        return jax.random.uniform(k, shape, jnp.float32, -bound, bound)

    w1 = u(ks[0], (input_dim, hidden), input_dim)
    b1 = u(ks[1], (1, hidden), input_dim)
    wv = u(ks[2], (hidden, 1), hidden)
    bv = u(ks[3], (1, 1), hidden)
    wa = u(ks[4], (hidden, n_actions), hidden)
    ba = u(ks[5], (1, n_actions), hidden)
    return w1, b1, wv, bv, wa, ba


# TODO(synk): optimiser (Adam), MSELoss and checkpoint save/load are training
# utilities with no Pallas forward-pass equivalent; only forward() is kernelized.

if __name__ == "__main__":
    key = jax.random.PRNGKey(0)
    batch, input_dim, hidden, n_actions = 2, 128, 512, 6

    k_x, k_p = jax.random.split(key)
    state = jax.random.normal(k_x, (batch, input_dim), jnp.float32)
    params = init_params(k_p, input_dim, hidden, n_actions)

    V_out, A_out = jax.jit(dueling_forward)(state, *params)
    V_out, A_out = jax.block_until_ready((V_out, A_out))
    assert V_out.shape == (batch, 1) and A_out.shape == (batch, n_actions)

    # Reference 1: same bf16-operand / f32-accumulate math as the kernel.
    w1, b1, wv, bv, wa, ba = params
    x_bf = state.astype(jnp.bfloat16)
    h_ref = jnp.maximum(
        jnp.dot(x_bf, w1.astype(jnp.bfloat16),
                preferred_element_type=jnp.float32) + b1, 0.0)
    h_bf = h_ref.astype(jnp.bfloat16)
    V_ref = jnp.dot(h_bf, wv.astype(jnp.bfloat16),
                    preferred_element_type=jnp.float32) + bv
    A_ref = jnp.dot(h_bf, wa.astype(jnp.bfloat16),
                    preferred_element_type=jnp.float32) + ba
    assert jnp.allclose(V_out, V_ref, atol=1e-2, rtol=1e-2)
    assert jnp.allclose(A_out, A_ref, atol=1e-2, rtol=1e-2)

    # Reference 2: full f32 PyTorch-equivalent math (loose tolerance for bf16 cast).
    h32 = jnp.maximum(state @ w1 + b1, 0.0)
    V32 = h32 @ wv + bv
    A32 = h32 @ wa + ba
    assert jnp.allclose(V_out, V32, atol=5e-2, rtol=5e-2)
    assert jnp.allclose(A_out, A32, atol=5e-2, rtol=5e-2)

    print("KERNEL_OK")
</pallas_src>

<mosaic_0001>
module attributes {stable_mosaic.version = 11 : i64} {
  func.func @dueling_kernel(%arg0: i32, %arg1: memref<8x128xbf16, #tpu.memory_space<vmem>>, %arg2: memref<128x512xbf16, #tpu.memory_space<vmem>>, %arg3: memref<1x512xf32, #tpu.memory_space<vmem>>, %arg4: memref<512x128xbf16, #tpu.memory_space<vmem>>, %arg5: memref<1x128xf32, #tpu.memory_space<vmem>>, %arg6: memref<8x128xf32, #tpu.memory_space<vmem>>) attributes {dimension_semantics = [#tpu.dimension_semantics<parallel>], iteration_bounds = array<i64: 1>, scalar_prefetch = 0 : i64, scratch_operands = 0 : i64, tpu.core_type = #tpu.core_type<tc>, window_params = [{transform_indices = @transform_0, window_bounds = array<i64: 8, 128>}, {pipeline_mode = #tpu.pipeline_mode<synchronous>, transform_indices = @transform_1, window_bounds = array<i64: 128, 512>}, {pipeline_mode = #tpu.pipeline_mode<synchronous>, transform_indices = @transform_2, window_bounds = array<i64: 1, 512>}, {pipeline_mode = #tpu.pipeline_mode<synchronous>, transform_indices = @transform_3, window_bounds = array<i64: 512, 128>}, {pipeline_mode = #tpu.pipeline_mode<synchronous>, transform_indices = @transform_4, window_bounds = array<i64: 1, 128>}, {transform_indices = @transform_5, window_bounds = array<i64: 8, 128>}]} {
    %c0 = arith.constant 0 : index
    %c0_0 = arith.constant 0 : index
    %0 = vector.load %arg1[%c0, %c0_0] : memref<8x128xbf16, #tpu.memory_space<vmem>>, vector<8x128xbf16>
    %c0_1 = arith.constant 0 : index
    %c0_2 = arith.constant 0 : index
    %1 = vector.load %arg2[%c0_1, %c0_2] : memref<128x512xbf16, #tpu.memory_space<vmem>>, vector<128x512xbf16>
    %cst = arith.constant dense<0.000000e+00> : vector<8x512xf32>
    %2 = tpu.matmul %0, %1, %cst {dimension_numbers = #tpu.dot_dimension_numbers<[1], [0], [0], [1], [0, 0, 1, 1], [], []>} : vector<8x128xbf16>, vector<128x512xbf16>, vector<8x512xf32> -> vector<8x512xf32>
    %c0_3 = arith.constant 0 : index
    %c0_4 = arith.constant 0 : index
    %3 = vector.load %arg3[%c0_3, %c0_4] : memref<1x512xf32, #tpu.memory_space<vmem>>, vector<1x512xf32>
    %4 = vector.broadcast %3 : vector<1x512xf32> to vector<8x512xf32>
    %5 = arith.addf %2, %4 : vector<8x512xf32>
    %cst_5 = arith.constant 0.000000e+00 : f32
    %6 = vector.broadcast %cst_5 : f32 to vector<8x512xf32>
    %7 = arith.maximumf %5, %6 : vector<8x512xf32>
    %8 = arith.truncf %7 : vector<8x512xf32> to vector<8x512xbf16>
    %c0_6 = arith.constant 0 : index
    %c0_7 = arith.constant 0 : index
    %9 = vector.load %arg4[%c0_6, %c0_7] : memref<512x128xbf16, #tpu.memory_space<vmem>>, vector<512x128xbf16>
    %cst_8 = arith.constant dense<0.000000e+00> : vector<8x128xf32>
    %10 = tpu.matmul %8, %9, %cst_8 {dimension_numbers = #tpu.dot_dimension_numbers<[1], [0], [0], [1], [0, 0, 1, 1], [], []>} : vector<8x512xbf16>, vector<512x128xbf16>, vector<8x128xf32> -> vector<8x128xf32>
    %c0_9 = arith.constant 0 : index
    %c0_10 = arith.constant 0 : index
    %11 = vector.load %arg5[%c0_9, %c0_10] : memref<1x128xf32, #tpu.memory_space<vmem>>, vector<1x128xf32>
    %12 = vector.broadcast %11 : vector<1x128xf32> to vector<8x128xf32>
    %13 = arith.addf %10, %12 : vector<8x128xf32>
    %c0_11 = arith.constant 0 : index
    %c0_12 = arith.constant 0 : index
    %14 = vector.load %arg6[%c0_11, %c0_12] : memref<8x128xf32, #tpu.memory_space<vmem>>, vector<8x128xf32>
    tpu.vector_store %arg6[%c0_11, %c0_12], %13 {strides = array<i32>} : memref<8x128xf32, #tpu.memory_space<vmem>>, vector<8x128xf32>,
    return
  }
  func.func @transform_0(%arg0: i32) -> (i32, i32) {
    %c0_i32 = arith.constant 0 : i32
    %c0_i32_0 = arith.constant 0 : i32
    return %arg0, %c0_i32 : i32, i32
  }
  func.func @transform_1(%arg0: i32) -> (i32, i32) {
    %c0_i32 = arith.constant 0 : i32
    %c0_i32_0 = arith.constant 0 : i32
    %c0_i32_1 = arith.constant 0 : i32
    return %c0_i32, %c0_i32_0 : i32, i32
  }
  func.func @transform_2(%arg0: i32) -> (i32, i32) {
    %c0_i32 = arith.constant 0 : i32
    %c0_i32_0 = arith.constant 0 : i32
    %c0_i32_1 = arith.constant 0 : i32
    return %c0_i32, %c0_i32_0 : i32, i32
  }
  func.func @transform_3(%arg0: i32) -> (i32, i32) {
    %c0_i32 = arith.constant 0 : i32
    %c0_i32_0 = arith.constant 0 : i32
    %c0_i32_1 = arith.constant 0 : i32
    return %c0_i32, %c0_i32_0 : i32, i32
  }
  func.func @transform_4(%arg0: i32) -> (i32, i32) {
    %c0_i32 = arith.constant 0 : i32
    %c0_i32_0 = arith.constant 0 : i32
    %c0_i32_1 = arith.constant 0 : i32
    return %c0_i32, %c0_i32_0 : i32, i32
  }
  func.func @transform_5(%arg0: i32) -> (i32, i32) {
    %c0_i32 = arith.constant 0 : i32
    %c0_i32_0 = arith.constant 0 : i32
    return %arg0, %c0_i32 : i32, i32
  }
}

</mosaic_0001>

<llo_original>
// kernel: dueling_forward.1
$region0: #{dueling_forward.1}
  #allocation0 [shape = 'u32[]', space=smem, size = 0x4, offset = 0x4, fixed_abs, tag = 'smem constant byte address 0x4 - core index']
  #allocation1 [shape = 'u32[72,128]{1,0:T(1,128)}', space=vmem, size = 0x9000, scoped, tag = 'internal scratch']
  %s0 = inlined_call_operand.vmem [shape: bf16[8,128], index: 0, kind: input, shape index: {}]
  %s1 = inlined_call_operand.vmem [shape: bf16[128,512], index: 1, kind: input, shape index: {}]
  %s2 = inlined_call_operand.vmem [shape: f32[1,512], index: 2, kind: input, shape index: {}]
  %s3 = inlined_call_operand.vmem [shape: bf16[512,128], index: 3, kind: input, shape index: {}]
  %s4 = inlined_call_operand.vmem [shape: f32[1,128], index: 4, kind: input, shape index: {}]
  %s5 = inlined_call_operand.vmem [shape: f32[8,128], index: 5, kind: output, shape index: {}]
  %s6 = sld [smem:[#allocation0]]
  $region30: #{dueling_forward.1} parent=0
    _
  %s8 = ssub.s32 1, %s6
  %s9 = scalar_select 0, %s8, %s6
  // Predicated region
  $region2: #{dueling_forward.1} parent=0 // pred_check
    _
  $region3: #{dueling_forward.1} parent=0 // pred_check_branch
    %11 = sbr.rel (0) target = $region5
  $region4: #{dueling_forward.1} parent=0 // pred_region
    _
  $region5: #{dueling_forward.1} parent=0 // pred_fallthru
    _
  // Predicated region
  $region6: #{dueling_forward.1} parent=0 // pred_check
    _
  $region7: #{dueling_forward.1} parent=0 // pred_check_branch
    %13 = sbr.rel (0) target = $region9
  $region8: #{dueling_forward.1} parent=0 // pred_region
    _
  $region9: #{dueling_forward.1} parent=0 // pred_fallthru
    _
  // Predicated region
  $region10: #{dueling_forward.1} parent=0 // pred_check
    _
  $region11: #{dueling_forward.1} parent=0 // pred_check_branch
    %15 = sbr.rel (0) target = $region13
  $region12: #{dueling_forward.1} parent=0 // pred_region
    _
  $region13: #{dueling_forward.1} parent=0 // pred_fallthru
    _
  // Predicated region
  $region14: #{dueling_forward.1} parent=0 // pred_check
    _
  $region15: #{dueling_forward.1} parent=0 // pred_check_branch
    %17 = sbr.rel (0) target = $region17
  $region16: #{dueling_forward.1} parent=0 // pred_region
    _
  $region17: #{dueling_forward.1} parent=0 // pred_fallthru
    _
  // Predicated region
  $region18: #{dueling_forward.1} parent=0 // pred_check
    _
  $region19: #{dueling_forward.1} parent=0 // pred_check_branch
    %19 = sbr.rel (0) target = $region21
  $region20: #{dueling_forward.1} parent=0 // pred_region
    _
  $region21: #{dueling_forward.1} parent=0 // pred_fallthru
    _
  %v20 = vld [vmem:[%s0] sm:$0xf]
  %v21 = vld [vmem:[%s1] sm:$0xff]
  %v22 = vld [vmem:[%s1 + $0x8] sm:$0xff]
  %v23 = vld [vmem:[%s1 + $0x10] sm:$0xff]
  %v24 = vld [vmem:[%s1 + $0x18] sm:$0xff]
  %v25 = vld [vmem:[%s1 + $0x20] sm:$0xff]
  %v26 = vld [vmem:[%s1 + $0x28] sm:$0xff]
  %v27 = vld [vmem:[%s1 + $0x30] sm:$0xff]
  %v28 = vld [vmem:[%s1 + $0x38] sm:$0xff]
  %v29 = vld [vmem:[%s1 + $0x40] sm:$0xff]
  %v30 = vld [vmem:[%s1 + $0x48] sm:$0xff]
  %v31 = vld [vmem:[%s1 + $0x50] sm:$0xff]
  %v32 = vld [vmem:[%s1 + $0x58] sm:$0xff]
  %v33 = vld [vmem:[%s1 + $0x60] sm:$0xff]
  %v34 = vld [vmem:[%s1 + $0x68] sm:$0xff]
  %v35 = vld [vmem:[%s1 + $0x70] sm:$0xff]
  %v36 = vld [vmem:[%s1 + $0x78] sm:$0xff]
  %v37 = vld [vmem:[%s1 + $0x80] sm:$0xff]
  %v38 = vld [vmem:[%s1 + $0x88] sm:$0xff]
  %v39 = vld [vmem:[%s1 + $0x90] sm:$0xff]
  %v40 = vld [vmem:[%s1 + $0x98] sm:$0xff]
  %v41 = vld [vmem:[%s1 + $0xa0] sm:$0xff]
  %v42 = vld [vmem:[%s1 + $0xa8] sm:$0xff]
  %v43 = vld [vmem:[%s1 + $0xb0] sm:$0xff]
  %v44 = vld [vmem:[%s1 + $0xb8] sm:$0xff]
  %v45 = vld [vmem:[%s1 + $0xc0] sm:$0xff]
  %v46 = vld [vmem:[%s1 + $0xc8] sm:$0xff]
  %v47 = vld [vmem:[%s1 + $0xd0] sm:$0xff]
  %v48 = vld [vmem:[%s1 + $0xd8] sm:$0xff]
  %v49 = vld [vmem:[%s1 + $0xe0] sm:$0xff]
  %v50 = vld [vmem:[%s1 + $0xe8] sm:$0xff]
  %v51 = vld [vmem:[%s1 + $0xf0] sm:$0xff]
  %v52 = vld [vmem:[%s1 + $0xf8] sm:$0xff]
  %v53 = vld [vmem:[%s2] sm:$0xf]
  %v55 = vperm.slane %v53, 0
  %v56 = vperm.slane %v53, 1
  %v57 = vperm.slane %v53, 2
  %v58 = vperm.slane %v53, 3
  %v95 = vunpack.c.l.b16 %v21
  %v96 = vunpack.c.h.b16 %v21
  %v97 = vunpack.c.l.b16 %v22
  %v98 = vunpack.c.h.b16 %v22
  %v99 = vunpack.c.l.b16 %v23
  %v100 = vunpack.c.h.b16 %v23
  %v101 = vunpack.c.l.b16 %v24
  %v102 = vunpack.c.h.b16 %v24
  %v103 = vunpack.c.l.b16 %v25
  %v104 = vunpack.c.h.b16 %v25
  %v105 = vunpack.c.l.b16 %v26
  %v106 = vunpack.c.h.b16 %v26
  %v107 = vunpack.c.l.b16 %v27
  %v108 = vunpack.c.h.b16 %v27
  %v109 = vunpack.c.l.b16 %v28
  %v110 = vunpack.c.h.b16 %v28
  %v111 = vunpack.c.l.b16 %v29
  %v112 = vunpack.c.h.b16 %v29
  %v113 = vunpack.c.l.b16 %v30
  %v114 = vunpack.c.h.b16 %v30
  %v115 = vunpack.c.l.b16 %v31
  %v116 = vunpack.c.h.b16 %v31
  %v117 = vunpack.c.l.b16 %v32
  %v118 = vunpack.c.h.b16 %v32
  %v119 = vunpack.c.l.b16 %v33
  %v120 = vunpack.c.h.b16 %v33
  %v121 = vunpack.c.l.b16 %v34
  %v122 = vunpack.c.h.b16 %v34
  %v123 = vunpack.c.l.b16 %v35
  %v124 = vunpack.c.h.b16 %v35
  %v125 = vunpack.c.l.b16 %v36
  %v126 = vunpack.c.h.b16 %v36
  %v127 = vunpack.c.l.b16 %v37
  %v128 = vunpack.c.h.b16 %v37
  %v129 = vunpack.c.l.b16 %v38
  %v130 = vunpack.c.h.b16 %v38
  %v131 = vunpack.c.l.b16 %v39
  %v132 = vunpack.c.h.b16 %v39
  %v133 = vunpack.c.l.b16 %v40
  %v134 = vunpack.c.h.b16 %v40
  %v135 = vunpack.c.l.b16 %v41
  %v136 = vunpack.c.h.b16 %v41
  %v137 = vunpack.c.l.b16 %v42
  %v138 = vunpack.c.h.b16 %v42
  %v139 = vunpack.c.l.b16 %v43
  %v140 = vunpack.c.h.b16 %v43
  %v141 = vunpack.c.l.b16 %v44
  %v142 = vunpack.c.h.b16 %v44
  %v143 = vunpack.c.l.b16 %v45
  %v144 = vunpack.c.h.b16 %v45
  %v145 = vunpack.c.l.b16 %v46
  %v146 = vunpack.c.h.b16 %v46
  %v147 = vunpack.c.l.b16 %v47
  %v148 = vunpack.c.h.b16 %v47
  %v149 = vunpack.c.l.b16 %v48
  %v150 = vunpack.c.h.b16 %v48
  %v151 = vunpack.c.l.b16 %v49
  %v152 = vunpack.c.h.b16 %v49
  %v153 = vunpack.c.l.b16 %v50
  %v154 = vunpack.c.h.b16 %v50
  %v155 = vunpack.c.l.b16 %v51
  %v156 = vunpack.c.h.b16 %v51
  %v157 = vunpack.c.l.b16 %v52
  %v158 = vunpack.c.h.b16 %v52
  %v159 = vpack.c.b16 %v99, %v95
  %v160 = vpack.c.b16 %v100, %v96
  %v161 = vpack.c.b16 %v101, %v97
  %v162 = vpack.c.b16 %v102, %v98
  %v163 = vpack.c.b16 %v107, %v103
  %v164 = vpack.c.b16 %v108, %v104
  %v165 = vpack.c.b16 %v109, %v105
  %v166 = vpack.c.b16 %v110, %v106
  %v167 = vpack.c.b16 %v115, %v111
  %v168 = vpack.c.b16 %v116, %v112
  %v169 = vpack.c.b16 %v117, %v113
  %v170 = vpack.c.b16 %v118, %v114
  %v171 = vpack.c.b16 %v123, %v119
  %v172 = vpack.c.b16 %v124, %v120
  %v173 = vpack.c.b16 %v125, %v121
  %v174 = vpack.c.b16 %v126, %v122
  %v175 = vpack.c.b16 %v131, %v127
  %v176 = vpack.c.b16 %v132, %v128
  %v177 = vpack.c.b16 %v133, %v129
  %v178 = vpack.c.b16 %v134, %v130
  %v179 = vpack.c.b16 %v139, %v135
  %v180 = vpack.c.b16 %v140, %v136
  %v181 = vpack.c.b16 %v141, %v137
  %v182 = vpack.c.b16 %v142, %v138
  %v183 = vpack.c.b16 %v147, %v143
  %v184 = vpack.c.b16 %v148, %v144
  %v185 = vpack.c.b16 %v149, %v145
  %v186 = vpack.c.b16 %v150, %v146
  %v187 = vpack.c.b16 %v155, %v151
  %v188 = vpack.c.b16 %v156, %v152
  %v189 = vpack.c.b16 %v157, %v153
  %v190 = vpack.c.b16 %v158, %v154
  %223 = vmatpush.bf16.msra.mxu0 %v187
  %224 = vmatpush.bf16.msra.mxu0 %v183
  %225 = vmatpush.bf16.msra.mxu0 %v179
  %226 = vmatpush.bf16.msra.mxu0 %v175
  %227 = vmatpush.bf16.msra.mxu0 %v171
  %228 = vmatpush.bf16.msra.mxu0 %v167
  %229 = vmatpush.bf16.msra.mxu0 %v163
  %230 = vmatpush.bf16.msra.mxu0 %v159
  %231 = vmatmul.bf16.gmra.mxu0 %v20
  %v232 = vpop.f32.mrf.mxu0
  %v233 = vadd.f32 %v55, %v232
  %v234 = vpop.f32.mrf.mxu0
  %235 = vdwg.mxu0
  %236 = vmatpush.bf16.msra.mxu0 %v188
  %237 = vmatpush.bf16.msra.mxu0 %v184
  %238 = vmatpush.bf16.msra.mxu0 %v180
  %239 = vmatpush.bf16.msra.mxu0 %v176
  %240 = vmatpush.bf16.msra.mxu0 %v172
  %241 = vmatpush.bf16.msra.mxu0 %v168
  %242 = vmatpush.bf16.msra.mxu0 %v164
  %243 = vmatpush.bf16.msra.mxu0 %v160
  %244 = vmatmul.bf16.gmra.mxu0 %v20
  %v245 = vpop.f32.mrf.mxu0
  %v246 = vadd.f32 %v56, %v245
  %v247 = vpop.f32.mrf.mxu0
  %248 = vdwg.mxu0
  %249 = vmatpush.bf16.msra.mxu0 %v189
  %250 = vmatpush.bf16.msra.mxu0 %v185
  %251 = vmatpush.bf16.msra.mxu0 %v181
  %252 = vmatpush.bf16.msra.mxu0 %v177
  %253 = vmatpush.bf16.msra.mxu0 %v173
  %254 = vmatpush.bf16.msra.mxu0 %v169
  %255 = vmatpush.bf16.msra.mxu0 %v165
  %256 = vmatpush.bf16.msra.mxu0 %v161
  %257 = vmatmul.bf16.gmra.mxu0 %v20
  %v258 = vpop.f32.mrf.mxu0
  %v259 = vadd.f32 %v57, %v258
  %v260 = vpop.f32.mrf.mxu0
  %261 = vdwg.mxu0
  %262 = vmatpush.bf16.msra.mxu0 %v190
  %263 = vmatpush.bf16.msra.mxu0 %v186
  %264 = vmatpush.bf16.msra.mxu0 %v182
  %265 = vmatpush.bf16.msra.mxu0 %v178
  %266 = vmatpush.bf16.msra.mxu0 %v174
  %267 = vmatpush.bf16.msra.mxu0 %v170
  %268 = vmatpush.bf16.msra.mxu0 %v166
  %269 = vmatpush.bf16.msra.mxu0 %v162
  %270 = vmatmul.bf16.gmra.mxu0 %v20
  %v271 = vpop.f32.mrf.mxu0
  %v272 = vadd.f32 %v58, %v271
  %v273 = vpop.f32.mrf.mxu0
  %274 = vdwg.mxu0
  %v275 = vmax.f32 %v233, 0.0
  %v276 = vmax.f32 %v246, 0.0
  %v277 = vmax.f32 %v259, 0.0
  %v278 = vmax.f32 %v272, 0.0
  %v279 = vpack.c.bf16 %v275, %v275
  %v280 = vpack.c.bf16 %v276, %v276
  %v281 = vpack.c.bf16 %v277, %v277
  %v282 = vpack.c.bf16 %v278, %v278
  %v283 = vld [vmem:[%s3] sm:$0xf]
  %v284 = vld [vmem:[%s3 + $0x4] sm:$0xf]
  %v285 = vld [vmem:[%s3 + $0x8] sm:$0xf]
  %v286 = vld [vmem:[%s3 + $0xc] sm:$0xf]
  %v287 = vld [vmem:[%s3 + $0x10] sm:$0xf]
  %v288 = vld [vmem:[%s3 + $0x14] sm:$0xf]
  %v289 = vld [vmem:[%s3 + $0x18] sm:$0xf]
  %v290 = vld [vmem:[%s3 + $0x1c] sm:$0xf]
  %v291 = vld [vmem:[%s3 + $0x20] sm:$0xf]
  %v292 = vld [vmem:[%s3 + $0x24] sm:$0xf]
  %v293 = vld [vmem:[%s3 + $0x28] sm:$0xf]
  %v294 = vld [vmem:[%s3 + $0x2c] sm:$0xf]
  %v295 = vld [vmem:[%s3 + $0x30] sm:$0xf]
  %v296 = vld [vmem:[%s3 + $0x34] sm:$0xf]
  %v297 = vld [vmem:[%s3 + $0x38] sm:$0xf]
  %v298 = vld [vmem:[%s3 + $0x3c] sm:$0xf]
  %v299 = vld [vmem:[%s3 + $0x40] sm:$0xf]
  %v300 = vld [vmem:[%s3 + $0x44] sm:$0xf]
  %v301 = vld [vmem:[%s3 + $0x48] sm:$0xf]
  %v302 = vld [vmem:[%s3 + $0x4c] sm:$0xf]
  %v303 = vld [vmem:[%s3 + $0x50] sm:$0xf]
  %v304 = vld [vmem:[%s3 + $0x54] sm:$0xf]
  %v305 = vld [vmem:[%s3 + $0x58] sm:$0xf]
  %v306 = vld [vmem:[%s3 + $0x5c] sm:$0xf]
  %v307 = vld [vmem:[%s3 + $0x60] sm:$0xf]
  %v308 = vld [vmem:[%s3 + $0x64] sm:$0xf]
  %v309 = vld [vmem:[%s3 + $0x68] sm:$0xf]
  %v310 = vld [vmem:[%s3 + $0x6c] sm:$0xf]
  %v311 = vld [vmem:[%s3 + $0x70] sm:$0xf]
  %v312 = vld [vmem:[%s3 + $0x74] sm:$0xf]
  %v313 = vld [vmem:[%s3 + $0x78] sm:$0xf]
  %v314 = vld [vmem:[%s3 + $0x7c] sm:$0xf]
  %v315 = vld [vmem:[%s3 + $0x80] sm:$0xf]
  %v316 = vld [vmem:[%s3 + $0x84] sm:$0xf]
  %v317 = vld [vmem:[%s3 + $0x88] sm:$0xf]
  %v318 = vld [vmem:[%s3 + $0x8c] sm:$0xf]
  %v319 = vld [vmem:[%s3 + $0x90] sm:$0xf]
  %v320 = vld [vmem:[%s3 + $0x94] sm:$0xf]
  %v321 = vld [vmem:[%s3 + $0x98] sm:$0xf]
  %v322 = vld [vmem:[%s3 + $0x9c] sm:$0xf]
  %v323 = vld [vmem:[%s3 + $0xa0] sm:$0xf]
  %v324 = vld [vmem:[%s3 + $0xa4] sm:$0xf]
  %v325 = vld [vmem:[%s3 + $0xa8] sm:$0xf]
  %v326 = vld [vmem:[%s3 + $0xac] sm:$0xf]
  %v327 = vld [vmem:[%s3 + $0xb0] sm:$0xf]
  %v328 = vld [vmem:[%s3 + $0xb4] sm:$0xf]
  %v329 = vld [vmem:[%s3 + $0xb8] sm:$0xf]
  %v330 = vld [vmem:[%s3 + $0xbc] sm:$0xf]
  %v331 = vld [vmem:[%s3 + $0xc0] sm:$0xf]
  %v332 = vld [vmem:[%s3 + $0xc4] sm:$0xf]
  %v333 = vld [vmem:[%s3 + $0xc8] sm:$0xf]
  %v334 = vld [vmem:[%s3 + $0xcc] sm:$0xf]
  %v335 = vld [vmem:[%s3 + $0xd0] sm:$0xf]
  %v336 = vld [vmem:[%s3 + $0xd4] sm:$0xf]
  %v337 = vld [vmem:[%s3 + $0xd8] sm:$0xf]
  %v338 = vld [vmem:[%s3 + $0xdc] sm:$0xf]
  %v339 = vld [vmem:[%s3 + $0xe0] sm:$0xf]
  %v340 = vld [vmem:[%s3 + $0xe4] sm:$0xf]
  %v341 = vld [vmem:[%s3 + $0xe8] sm:$0xf]
  %v342 = vld [vmem:[%s3 + $0xec] sm:$0xf]
  %v343 = vld [vmem:[%s3 + $0xf0] sm:$0xf]
  %v344 = vld [vmem:[%s3 + $0xf4] sm:$0xf]
  %v345 = vld [vmem:[%s3 + $0xf8] sm:$0xf]
  %v346 = vld [vmem:[%s3 + $0xfc] sm:$0xf]
  %v347 = vld [vmem:[%s4] sm:$0x1]
  %v349 = vperm.slane %v347, 0
  %v415 = vunpack.c.l.b16 %v283
  %v416 = vunpack.c.l.b16 %v284
  %v417 = vunpack.c.l.b16 %v285
  %v418 = vunpack.c.l.b16 %v286
  %v419 = vunpack.c.l.b16 %v287
  %v420 = vunpack.c.l.b16 %v288
  %v421 = vunpack.c.l.b16 %v289
  %v422 = vunpack.c.l.b16 %v290
  %v423 = vunpack.c.l.b16 %v291
  %v424 = vunpack.c.l.b16 %v292
  %v425 = vunpack.c.l.b16 %v293
  %v426 = vunpack.c.l.b16 %v294
  %v427 = vunpack.c.l.b16 %v295
  %v428 = vunpack.c.l.b16 %v296
  %v429 = vunpack.c.l.b16 %v297
  %v430 = vunpack.c.l.b16 %v298
  %v431 = vunpack.c.l.b16 %v299
  %v432 = vunpack.c.l.b16 %v300
  %v433 = vunpack.c.l.b16 %v301
  %v434 = vunpack.c.l.b16 %v302
  %v435 = vunpack.c.l.b16 %v303
  %v436 = vunpack.c.l.b16 %v304
  %v437 = vunpack.c.l.b16 %v305
  %v438 = vunpack.c.l.b16 %v306
  %v439 = vunpack.c.l.b16 %v307
  %v440 = vunpack.c.l.b16 %v308
  %v441 = vunpack.c.l.b16 %v309
  %v442 = vunpack.c.l.b16 %v310
  %v443 = vunpack.c.l.b16 %v311
  %v444 = vunpack.c.l.b16 %v312
  %v445 = vunpack.c.l.b16 %v313
  %v446 = vunpack.c.l.b16 %v314
  %v447 = vunpack.c.l.b16 %v315
  %v448 = vunpack.c.l.b16 %v316
  %v449 = vunpack.c.l.b16 %v317
  %v450 = vunpack.c.l.b16 %v318
  %v451 = vunpack.c.l.b16 %v319
  %v452 = vunpack.c.l.b16 %v320
  %v453 = vunpack.c.l.b16 %v321
  %v454 = vunpack.c.l.b16 %v322
  %v455 = vunpack.c.l.b16 %v323
  %v456 = vunpack.c.l.b16 %v324
  %v457 = vunpack.c.l.b16 %v325
  %v458 = vunpack.c.l.b16 %v326
  %v459 = vunpack.c.l.b16 %v327
  %v460 = vunpack.c.l.b16 %v328
  %v461 = vunpack.c.l.b16 %v329
  %v462 = vunpack.c.l.b16 %v330
  %v463 = vunpack.c.l.b16 %v331
  %v464 = vunpack.c.l.b16 %v332
  %v465 = vunpack.c.l.b16 %v333
  %v466 = vunpack.c.l.b16 %v334
  %v467 = vunpack.c.l.b16 %v335
  %v468 = vunpack.c.l.b16 %v336
  %v469 = vunpack.c.l.b16 %v337
  %v470 = vunpack.c.l.b16 %v338
  %v471 = vunpack.c.l.b16 %v339
  %v472 = vunpack.c.l.b16 %v340
  %v473 = vunpack.c.l.b16 %v341
  %v474 = vunpack.c.l.b16 %v342
  %v475 = vunpack.c.l.b16 %v343
  %v476 = vunpack.c.l.b16 %v344
  %v477 = vunpack.c.l.b16 %v345
  %v478 = vunpack.c.l.b16 %v346
  %v479 = vpack.c.b16 %v416, %v415
  %v480 = vpack.c.b16 %v418, %v417
  %v481 = vpack.c.b16 %v420, %v419
  %v482 = vpack.c.b16 %v422, %v421
  %v483 = vpack.c.b16 %v424, %v423
  %v484 = vpack.c.b16 %v426, %v425
  %v485 = vpack.c.b16 %v428, %v427
  %v486 = vpack.c.b16 %v430, %v429
  %v487 = vpack.c.b16 %v432, %v431
  %v488 = vpack.c.b16 %v434, %v433
  %v489 = vpack.c.b16 %v436, %v435
  %v490 = vpack.c.b16 %v438, %v437
  %v491 = vpack.c.b16 %v440, %v439
  %v492 = vpack.c.b16 %v442, %v441
  %v493 = vpack.c.b16 %v444, %v443
  %v494 = vpack.c.b16 %v446, %v445
  %v495 = vpack.c.b16 %v448, %v447
  %v496 = vpack.c.b16 %v450, %v449
  %v497 = vpack.c.b16 %v452, %v451
  %v498 = vpack.c.b16 %v454, %v453
  %v499 = vpack.c.b16 %v456, %v455
  %v500 = vpack.c.b16 %v458, %v457
  %v501 = vpack.c.b16 %v460, %v459
  %v502 = vpack.c.b16 %v462, %v461
  %v503 = vpack.c.b16 %v464, %v463
  %v504 = vpack.c.b16 %v466, %v465
  %v505 = vpack.c.b16 %v468, %v467
  %v506 = vpack.c.b16 %v470, %v469
  %v507 = vpack.c.b16 %v472, %v471
  %v508 = vpack.c.b16 %v474, %v473
  %v509 = vpack.c.b16 %v476, %v475
  %v510 = vpack.c.b16 %v478, %v477
  %543 = vmatpush.bf16.msra.mxu0 %v486
  %544 = vmatpush.bf16.msra.mxu0 %v485
  %545 = vmatpush.bf16.msra.mxu0 %v484
  %546 = vmatpush.bf16.msra.mxu0 %v483
  %547 = vmatpush.bf16.msra.mxu0 %v482
  %548 = vmatpush.bf16.msra.mxu0 %v481
  %549 = vmatpush.bf16.msra.mxu0 %v480
  %550 = vmatpush.bf16.msra.mxu0 %v479
  %551 = vmatmul.bf16.gmra.mxu0 %v279
  %v552 = vpop.f32.mrf.mxu0
  %v553 = vadd.f32 %v349, %v552
  %v554 = vpop.f32.mrf.mxu0
  %555 = vdwg.mxu0
  %556 = vmatpush.bf16.msra.mxu0 %v494
  %557 = vmatpush.bf16.msra.mxu0 %v493
  %558 = vmatpush.bf16.msra.mxu0 %v492
  %559 = vmatpush.bf16.msra.mxu0 %v491
  %560 = vmatpush.bf16.msra.mxu0 %v490
  %561 = vmatpush.bf16.msra.mxu0 %v489
  %562 = vmatpush.bf16.msra.mxu0 %v488
  %563 = vmatpush.bf16.msra.mxu0 %v487
  %564 = vmatmul.bf16.gmra.mxu0 %v280
  %v565 = vpop.f32.mrf.mxu0
  %v566 = vadd.f32 %v553, %v565
  %v567 = vpop.f32.mrf.mxu0
  %568 = vdwg.mxu0
  %569 = vmatpush.bf16.msra.mxu0 %v502
  %570 = vmatpush.bf16.msra.mxu0 %v501
  %571 = vmatpush.bf16.msra.mxu0 %v500
  %572 = vmatpush.bf16.msra.mxu0 %v499
  %573 = vmatpush.bf16.msra.mxu0 %v498
  %574 = vmatpush.bf16.msra.mxu0 %v497
  %575 = vmatpush.bf16.msra.mxu0 %v496
  %576 = vmatpush.bf16.msra.mxu0 %v495
  %577 = vmatmul.bf16.gmra.mxu0 %v281
  %v578 = vpop.f32.mrf.mxu0
  %v579 = vadd.f32 %v566, %v578
  %v580 = vpop.f32.mrf.mxu0
  %581 = vdwg.mxu0
  %582 = vmatpush.bf16.msra.mxu0 %v510
  %583 = vmatpush.bf16.msra.mxu0 %v509
  %584 = vmatpush.bf16.msra.mxu0 %v508
  %585 = vmatpush.bf16.msra.mxu0 %v507
  %586 = vmatpush.bf16.msra.mxu0 %v506
  %587 = vmatpush.bf16.msra.mxu0 %v505
  %588 = vmatpush.bf16.msra.mxu0 %v504
  %589 = vmatpush.bf16.msra.mxu0 %v503
  %590 = vmatmul.bf16.gmra.mxu0 %v282
  %v591 = vpop.f32.mrf.mxu0
  %v592 = vadd.f32 %v579, %v591
  %v593 = vpop.f32.mrf.mxu0
  %594 = vdwg.mxu0
  %595 = vst [vmem:[%s5] sm:$0xff] %v592
  // Predicated region
  $region22: #{dueling_forward.1} parent=0 // pred_check
    _
  $region23: #{dueling_forward.1} parent=0 // pred_check_branch
    %597 = sbr.rel (0) target = $region25
  $region24: #{dueling_forward.1} parent=0 // pred_region
    _
  $region25: #{dueling_forward.1} parent=0 // pred_fallthru
    _
  // Predicated region
  $region26: #{dueling_forward.1} parent=0 // pred_check
    _
  $region27: #{dueling_forward.1} parent=0 // pred_check_branch
    %599 = sbr.rel (0) target = $region29
  $region28: #{dueling_forward.1} parent=0 // pred_region
    _
  $region29: #{dueling_forward.1} parent=0 // pred_fallthru
    _

</llo_original>
